<compile_context>
chip_gen: v7x
topology: tpu7x:2x2x1
jax: 0.10.0
libtpu: 0.0.40
codegen_flags: <defaults>
</compile_context>

<pallas_src>
import jax
import jax.numpy as jnp
from jax.experimental import pallas as pl
from jax.experimental.pallas import tpu as pltpu

_LANE = 128          # vreg lane width
_SUBLANE = 8         # f32 sublanes per vreg
_VPU_IN_LIMIT = 64   # below this in_size, first projection stays on the VPU


def _round_up(n, m):
    return ((n + m - 1) // m) * m


# -----------------------------------------------------------------------------
# Kernels
# -----------------------------------------------------------------------------
def _mlp_kernel_out1_t(xt_ref, w1_ref, b1_ref, w2_ref, b2_ref, o_ref):
    """out_size == 1, small in_size: transposed, batch-on-lanes path.

    Shapes (all f32):
      xt_ref : (in, TB)   input, batch on lanes (lane-dense)
      w1_ref : (Hp, in)   hidden on sublanes, Hp % 8 == 0
      b1_ref : (Hp, 1)
      w2_ref : (Hp, 1)
      b2_ref : (1, 1)
      o_ref  : (1, TB)    lane-dense output
    Zero-padded hidden rows are exact: tanh(0*x + 0) = 0 and the padded w2
    rows are 0, so they contribute nothing to the sublane reduction.
    """
    xt = xt_ref[...]                                   # (in, TB)
    w1 = w1_ref[...]                                   # (Hp, in)
    in_size = xt.shape[0]
    # First projection on the VPU: K = in_size is tiny, so unrolled broadcast
    # multiply-adds (one outer product per input feature) beat paying MXU
    # push/pop latency and an awkward (TB, in) layout conversion.
    z = w1[:, 0:1] * xt[0:1, :]                        # (Hp, TB)
    for j in range(1, in_size):
        z = z + w1[:, j:j + 1] * xt[j:j + 1, :]
    h = jnp.tanh(z + b1_ref[...])                      # (Hp, TB)  EUP
    # Second projection: broadcast-mul (VPU) + sublane reduce (XLU) -> (1, TB).
    z2 = jnp.sum(h * w2_ref[...], axis=0, keepdims=True) + b2_ref[...]
    o_ref[...] = jax.nn.sigmoid(z2).astype(o_ref.dtype)


def _mlp_kernel_general(x_ref, w1_ref, b1_ref, w2_ref, b2_ref, o_ref):
    """General out_size / large in_size: both projections on the MXU."""
    x = x_ref[...]                                     # (TB, in)
    h = jnp.tanh(jnp.dot(x, w1_ref[...], preferred_element_type=jnp.float32)
                 + b1_ref[...])                        # (TB, Hp)
    z = jnp.dot(h, w2_ref[...], preferred_element_type=jnp.float32) + b2_ref[...]
    o_ref[...] = jax.nn.sigmoid(z).astype(o_ref.dtype)


# -----------------------------------------------------------------------------
# One-time parameter preparation (NOT in the per-call path)
# -----------------------------------------------------------------------------
def prepare_params(w1, b1, w2, b2):
    """PyTorch Linear layouts: w1 (hidden, in), b1 (hidden,), w2 (out, hidden), b2 (out,)."""
    hidden, in_size = w1.shape
    out_size = w2.shape[0]
    w1 = jnp.asarray(w1, jnp.float32)
    b1 = jnp.asarray(b1, jnp.float32)
    w2 = jnp.asarray(w2, jnp.float32)
    b2 = jnp.asarray(b2, jnp.float32)

    transposed = (out_size == 1) and (in_size < _VPU_IN_LIMIT)
    if transposed:
        # Hidden lives on SUBLANES -> pad to a multiple of 8 only (32 stays 32).
        hp = _round_up(hidden, _SUBLANE)
        w1p = jnp.zeros((hp, in_size), jnp.float32).at[:hidden, :].set(w1)   # (Hp, in)
        b1p = jnp.zeros((hp, 1), jnp.float32).at[:hidden, 0].set(b1)         # (Hp, 1)
        w2p = jnp.zeros((hp, 1), jnp.float32).at[:hidden, 0].set(w2[0])      # (Hp, 1)
        b2p = b2.reshape(1, 1)                                               # (1, 1)
    else:
        # Hidden lives on LANES for the MXU -> pad to a multiple of 128.
        hp = _round_up(hidden, _LANE)
        w1p = jnp.zeros((in_size, hp), jnp.float32).at[:, :hidden].set(w1.T)     # (in, Hp)
        b1p = jnp.zeros((1, hp), jnp.float32).at[:, :hidden].set(b1)             # (1, Hp)
        w2p = jnp.zeros((hp, out_size), jnp.float32).at[:hidden, :].set(w2.T)    # (Hp, out)
        b2p = b2.reshape(1, out_size)                                            # (1, out)
    return dict(transposed=transposed, hidden=hidden, hp=hp,
                in_size=in_size, out_size=out_size,
                tensors=(w1p, b1p, w2p, b2p))


# -----------------------------------------------------------------------------
# Forward
# -----------------------------------------------------------------------------
def _choose_tb(B, align, hp):
    """Batch tile: `align`-aligned, >=2 blocks when possible (so both v7x
    TensorCores get work), large enough to amortize the ~0.35us per-step
    overhead, and capped so the (hp, tb) f32 hidden intermediate stays well
    under every generation's scoped-VMEM default (v5e 16 MiB, v6e/v7x 32 MiB,
    v7x 64 MiB physical)."""
    if B <= align:
        return B                                   # single full-array block
    budget = 8 * 1024 * 1024                       # bytes for hidden intermediate
    cap = max(align, (budget // (4 * hp)) // align * align)
    cap = min(cap, 16384)
    half = -(-B // 2)                              # ceil(B/2) -> aim for >=2 blocks
    tb = _round_up(half, align)
    return min(tb, cap)


def nnet_forward(x, params):
    """x: (B, in_size) f32 -> (B, out_size) f32 = sigmoid(tanh(x W1^T + b1) W2^T + b2)."""
    w1p, b1p, w2p, b2p = params["tensors"]
    B, in_size = x.shape
    assert in_size == params["in_size"]
    out_size = params["out_size"]
    hidden = params["hidden"]
    hp = params["hp"]

    cost = pl.CostEstimate(
        flops=int(2 * B * in_size * hidden + 2 * B * hidden * out_size),
        transcendentals=int(B * (hidden + out_size)),
        bytes_accessed=int(4 * (B * in_size + B * out_size
                                + in_size * hidden + hidden * out_size
                                + hidden + out_size)),
    )
    cparams = pltpu.CompilerParams(
        dimension_semantics=("parallel",),          # batch axis: megacore-shardable
        vmem_limit_bytes=32 * 1024 * 1024,
    )

    if params["transposed"]:
        # Batch-on-lanes formulation: lane-dense activations and output.
        xt = x.T                                    # (in, B) — layout plumbing only
        tb = _choose_tb(B, _LANE, hp)
        nb = pl.cdiv(B, tb)
        grid_spec = pltpu.PrefetchScalarGridSpec(
            num_scalar_prefetch=0,
            grid=(nb,),
            in_specs=[
                pl.BlockSpec((in_size, tb), lambda i: (0, i)),
                pl.BlockSpec(w1p.shape, lambda i: (0, 0)),   # weights VMEM-resident
                pl.BlockSpec(b1p.shape, lambda i: (0, 0)),
                pl.BlockSpec(w2p.shape, lambda i: (0, 0)),
                pl.BlockSpec(b2p.shape, lambda i: (0, 0)),
            ],
            out_specs=pl.BlockSpec((1, tb), lambda i: (0, i)),
        )
        out_t = pl.pallas_call(
            _mlp_kernel_out1_t,
            out_shape=jax.ShapeDtypeStruct((1, B), jnp.float32),
            grid_spec=grid_spec,
            compiler_params=cparams,
            cost_estimate=cost,
        )(xt, w1p, b1p, w2p, b2p)
        return out_t.reshape(B, 1)                  # contiguous reshape, no copy
    else:
        tb = _choose_tb(B, _SUBLANE, hp)
        nb = pl.cdiv(B, tb)
        grid_spec = pltpu.PrefetchScalarGridSpec(
            num_scalar_prefetch=0,
            grid=(nb,),
            in_specs=[
                pl.BlockSpec((tb, in_size), lambda i: (i, 0)),
                pl.BlockSpec(w1p.shape, lambda i: (0, 0)),
                pl.BlockSpec(b1p.shape, lambda i: (0, 0)),
                pl.BlockSpec(w2p.shape, lambda i: (0, 0)),
                pl.BlockSpec(b2p.shape, lambda i: (0, 0)),
            ],
            out_specs=pl.BlockSpec((tb, out_size), lambda i: (i, 0)),
        )
        return pl.pallas_call(
            _mlp_kernel_general,
            out_shape=jax.ShapeDtypeStruct((B, out_size), jnp.float32),
            grid_spec=grid_spec,
            compiler_params=cparams,
            cost_estimate=cost,
        )(x, w1p, b1p, w2p, b2p)


def _reference(x, w1, b1, w2, b2):
    h = jnp.tanh(x @ w1.T + b1)
    return jax.nn.sigmoid(h @ w2.T + b2)


if __name__ == "__main__":
    key = jax.random.PRNGKey(0)

    # --- Primary config implied by the module: in_size=2 (df.iloc[:, 0:2]), out=1 ---
    B, IN, HIDDEN, OUT = 8, 2, 32, 1
    kx, kw1, kb1, kw2, kb2, k2 = jax.random.split(key, 6)

    x = jax.random.normal(kx, (B, IN), dtype=jnp.float32)
    w1 = jax.random.normal(kw1, (HIDDEN, IN), dtype=jnp.float32) * 0.5
    b1 = jax.random.normal(kb1, (HIDDEN,), dtype=jnp.float32) * 0.1
    w2 = jax.random.normal(kw2, (OUT, HIDDEN), dtype=jnp.float32) * 0.5
    b2 = jax.random.normal(kb2, (OUT,), dtype=jnp.float32) * 0.1

    params = prepare_params(w1, b1, w2, b2)          # one-time prep (not per-call)
    out = jax.block_until_ready(nnet_forward(x, params))
    ref = _reference(x, w1, b1, w2, b2)
    assert out.shape == (B, OUT)
    assert jnp.allclose(out, ref, atol=1e-5, rtol=1e-5), "mismatch (out=1, B=8)"

    # --- Multi-block, partial-last-block case on the lane-dense path ---
    B2 = 304                                          # > 2*128 and not a multiple of 128
    x2 = jax.random.normal(kx, (B2, IN), dtype=jnp.float32)
    out_big = jax.block_until_ready(nnet_forward(x2, params))
    ref_big = _reference(x2, w1, b1, w2, b2)
    assert out_big.shape == (B2, OUT)
    assert jnp.allclose(out_big, ref_big, atol=1e-5, rtol=1e-5), "mismatch (out=1, tiled)"

    # --- Also exercise the general (out_size > 1) MXU path ---
    OUT2 = 3
    kw2b, kb2b = jax.random.split(k2)
    w2b = jax.random.normal(kw2b, (OUT2, HIDDEN), dtype=jnp.float32) * 0.5
    b2b = jax.random.normal(kb2b, (OUT2,), dtype=jnp.float32) * 0.1
    params2 = prepare_params(w1, b1, w2b, b2b)
    out2 = jax.block_until_ready(nnet_forward(x, params2))
    ref2 = _reference(x, w1, b1, w2b, b2b)
    assert out2.shape == (B, OUT2)
    assert jnp.allclose(out2, ref2, atol=1e-5, rtol=1e-5), "mismatch (general path)"

    print("KERNEL_OK")
</pallas_src>

<mosaic_0001>
module attributes {stable_mosaic.version = 11 : i64} {
  func.func @_mlp_kernel_out1_t(%arg0: i32, %arg1: memref<2x8xf32, #tpu.memory_space<vmem>>, %arg2: memref<32x2xf32, #tpu.memory_space<vmem>>, %arg3: memref<32x1xf32, #tpu.memory_space<vmem>>, %arg4: memref<32x1xf32, #tpu.memory_space<vmem>>, %arg5: memref<1x1xf32, #tpu.memory_space<vmem>>, %arg6: memref<1x8xf32, #tpu.memory_space<vmem>>) attributes {dimension_semantics = [#tpu.dimension_semantics<parallel>], iteration_bounds = array<i64: 1>, scalar_prefetch = 0 : i64, scratch_operands = 0 : i64, tpu.core_type = #tpu.core_type<tc>, window_params = [{transform_indices = @transform_0, window_bounds = array<i64: 2, 8>}, {pipeline_mode = #tpu.pipeline_mode<synchronous>, transform_indices = @transform_1, window_bounds = array<i64: 32, 2>}, {pipeline_mode = #tpu.pipeline_mode<synchronous>, transform_indices = @transform_2, window_bounds = array<i64: 32, 1>}, {pipeline_mode = #tpu.pipeline_mode<synchronous>, transform_indices = @transform_3, window_bounds = array<i64: 32, 1>}, {pipeline_mode = #tpu.pipeline_mode<synchronous>, transform_indices = @transform_4, window_bounds = array<i64: 1, 1>}, {transform_indices = @transform_5, window_bounds = array<i64: 1, 8>}]} {
    %c0 = arith.constant 0 : index
    %c0_0 = arith.constant 0 : index
    %0 = vector.load %arg1[%c0, %c0_0] : memref<2x8xf32, #tpu.memory_space<vmem>>, vector<2x8xf32>
    %c0_1 = arith.constant 0 : index
    %c0_2 = arith.constant 0 : index
    %1 = vector.load %arg2[%c0_1, %c0_2] : memref<32x2xf32, #tpu.memory_space<vmem>>, vector<32x2xf32>
    %2 = vector.extract_strided_slice %1 {offsets = [0, 0], sizes = [32, 1], strides = [1, 1]} : vector<32x2xf32> to vector<32x1xf32>
    %3 = vector.extract_strided_slice %0 {offsets = [0, 0], sizes = [1, 8], strides = [1, 1]} : vector<2x8xf32> to vector<1x8xf32>
    %4 = vector.broadcast %2 : vector<32x1xf32> to vector<32x8xf32>
    %5 = vector.broadcast %3 : vector<1x8xf32> to vector<32x8xf32>
    %6 = arith.mulf %4, %5 : vector<32x8xf32>
    %7 = vector.extract_strided_slice %1 {offsets = [0, 1], sizes = [32, 1], strides = [1, 1]} : vector<32x2xf32> to vector<32x1xf32>
    %8 = vector.extract_strided_slice %0 {offsets = [1, 0], sizes = [1, 8], strides = [1, 1]} : vector<2x8xf32> to vector<1x8xf32>
    %9 = vector.broadcast %7 : vector<32x1xf32> to vector<32x8xf32>
    %10 = vector.broadcast %8 : vector<1x8xf32> to vector<32x8xf32>
    %11 = arith.mulf %9, %10 : vector<32x8xf32>
    %12 = arith.addf %6, %11 : vector<32x8xf32>
    %c0_3 = arith.constant 0 : index
    %c0_4 = arith.constant 0 : index
    %13 = vector.load %arg3[%c0_3, %c0_4] : memref<32x1xf32, #tpu.memory_space<vmem>>, vector<32x1xf32>
    %14 = vector.broadcast %13 : vector<32x1xf32> to vector<32x8xf32>
    %15 = arith.addf %12, %14 : vector<32x8xf32>
    %16 = math.tanh %15 : vector<32x8xf32>
    %c0_5 = arith.constant 0 : index
    %c0_6 = arith.constant 0 : index
    %17 = vector.load %arg4[%c0_5, %c0_6] : memref<32x1xf32, #tpu.memory_space<vmem>>, vector<32x1xf32>
    %18 = vector.broadcast %17 : vector<32x1xf32> to vector<32x8xf32>
    %19 = arith.mulf %16, %18 : vector<32x8xf32>
    %cst = arith.constant dense<0.000000e+00> : vector<8xf32>
    %20 = vector.multi_reduction <add>, %19, %cst [0] : vector<32x8xf32> to vector<8xf32>
    %21 = vector.shape_cast %20 : vector<8xf32> to vector<1x8xf32>
    %c0_7 = arith.constant 0 : index
    %c0_8 = arith.constant 0 : index
    %22 = vector.load %arg5[%c0_7, %c0_8] : memref<1x1xf32, #tpu.memory_space<vmem>>, vector<1x1xf32>
    %23 = vector.broadcast %22 : vector<1x1xf32> to vector<1x8xf32>
    %24 = arith.addf %21, %23 : vector<1x8xf32>
    %25 = arith.negf %24 : vector<1x8xf32>
    %26 = math.exp %25 : vector<1x8xf32>
    %cst_9 = arith.constant 1.000000e+00 : f32
    %27 = vector.broadcast %cst_9 : f32 to vector<1x8xf32>
    %28 = arith.addf %27, %26 : vector<1x8xf32>
    %29 = arith.divf %27, %28 : vector<1x8xf32>
    %c0_10 = arith.constant 0 : index
    %c0_11 = arith.constant 0 : index
    %30 = vector.load %arg6[%c0_10, %c0_11] : memref<1x8xf32, #tpu.memory_space<vmem>>, vector<1x8xf32>
    tpu.vector_store %arg6[%c0_10, %c0_11], %29 {strides = array<i32>} : memref<1x8xf32, #tpu.memory_space<vmem>>, vector<1x8xf32>,
    return
  }
  func.func @transform_0(%arg0: i32) -> (i32, i32) {
    %c0_i32 = arith.constant 0 : i32
    %c0_i32_0 = arith.constant 0 : i32
    return %c0_i32, %arg0 : i32, i32
  }
  func.func @transform_1(%arg0: i32) -> (i32, i32) {
    %c0_i32 = arith.constant 0 : i32
    %c0_i32_0 = arith.constant 0 : i32
    %c0_i32_1 = arith.constant 0 : i32
    return %c0_i32, %c0_i32_0 : i32, i32
  }
  func.func @transform_2(%arg0: i32) -> (i32, i32) {
    %c0_i32 = arith.constant 0 : i32
    %c0_i32_0 = arith.constant 0 : i32
    %c0_i32_1 = arith.constant 0 : i32
    return %c0_i32, %c0_i32_0 : i32, i32
  }
  func.func @transform_3(%arg0: i32) -> (i32, i32) {
    %c0_i32 = arith.constant 0 : i32
    %c0_i32_0 = arith.constant 0 : i32
    %c0_i32_1 = arith.constant 0 : i32
    return %c0_i32, %c0_i32_0 : i32, i32
  }
  func.func @transform_4(%arg0: i32) -> (i32, i32) {
    %c0_i32 = arith.constant 0 : i32
    %c0_i32_0 = arith.constant 0 : i32
    %c0_i32_1 = arith.constant 0 : i32
    return %c0_i32, %c0_i32_0 : i32, i32
  }
  func.func @transform_5(%arg0: i32) -> (i32, i32) {
    %c0_i32 = arith.constant 0 : i32
    %c0_i32_0 = arith.constant 0 : i32
    return %c0_i32, %arg0 : i32, i32
  }
}

</mosaic_0001>

<llo_original>
// kernel: tpu_custom_call.1
$region0: #{tpu_custom_call.1}
  #allocation0 [shape = 'u32[]', space=smem, size = 0x4, offset = 0x4, fixed_abs, tag = 'smem constant byte address 0x4 - core index']
  #allocation1 [shape = 'u32[144,128]{1,0:T(1,128)}', space=vmem, size = 0x12000, scoped, tag = 'internal scratch']
  #allocation2 [shape = 'f32[1,1]{1,0:T(1,128)S(1)}', space=vmem, size = 0x200, scoped, tag = 'scoped memory for tpu_custom_call.1']
  %s0 = inlined_call_operand.vmem [shape: f32[2,8], index: 0, kind: input, shape index: {}]
  %s1 = inlined_call_operand.vmem [shape: f32[32,2], index: 1, kind: input, shape index: {}]
  %s2 = inlined_call_operand.vmem [shape: f32[32,1], index: 2, kind: input, shape index: {}]
  %s3 = inlined_call_operand.vmem [shape: f32[32,1], index: 3, kind: input, shape index: {}]
  %s4 = inlined_call_operand.<no memory space> [shape: f32[1,1], index: 4, kind: input, shape index: {}]
  %s5 = inlined_call_operand.hbm [shape: f32[1,8], index: 5, kind: output, shape index: {}]
  %s6 = sld [smem:[#allocation0]]
  $region30: #{tpu_custom_call.1} parent=0
    _
  %s8 = ssub.s32 1, %s6
  %s9 = scalar_select 0, %s8, %s6
  %v10 = vstv %s4
  %11 = vst [vmem:[#allocation2] sm:$0x1] %v10
  $region1: #{tpu_custom_call.1} parent=0
    #allocation3 [shape = 'u8[512]{0}', space=vmem, size = 0x400, scoped, tag = 'output window, operand 0, single buffered']
    #allocation4 [shape = 's32[1]{0}', space=sflag, size = 0x4, scoped, tag = 'scoped memory for tpu_custom_call.1']
    %12 = vsyncpa [#allocation4], 0
    // Predicated region
    $region2: #{tpu_custom_call.1} parent=1 // pred_check
      _
    $region3: #{tpu_custom_call.1} parent=1 // pred_check_branch
      %14 = sbr.rel (0) target = $region5
    $region4: #{tpu_custom_call.1} parent=1 // pred_region
      _
    $region5: #{tpu_custom_call.1} parent=1 // pred_fallthru
      _
    // Predicated region
    $region6: #{tpu_custom_call.1} parent=1 // pred_check
      _
    $region7: #{tpu_custom_call.1} parent=1 // pred_check_branch
      %16 = sbr.rel (0) target = $region9
    $region8: #{tpu_custom_call.1} parent=1 // pred_region
      _
    $region9: #{tpu_custom_call.1} parent=1 // pred_fallthru
      _
    // Predicated region
    $region10: #{tpu_custom_call.1} parent=1 // pred_check
      _
    $region11: #{tpu_custom_call.1} parent=1 // pred_check_branch
      %18 = sbr.rel (0) target = $region13
    $region12: #{tpu_custom_call.1} parent=1 // pred_region
      _
    $region13: #{tpu_custom_call.1} parent=1 // pred_fallthru
      _
    // Predicated region
    $region14: #{tpu_custom_call.1} parent=1 // pred_check
      _
    $region15: #{tpu_custom_call.1} parent=1 // pred_check_branch
      %20 = sbr.rel (0) target = $region17
    $region16: #{tpu_custom_call.1} parent=1 // pred_region
      _
    $region17: #{tpu_custom_call.1} parent=1 // pred_fallthru
      _
    // Predicated region
    $region18: #{tpu_custom_call.1} parent=1 // pred_check
      _
    $region19: #{tpu_custom_call.1} parent=1 // pred_check_branch
      %22 = sbr.rel (0) target = $region21
    $region20: #{tpu_custom_call.1} parent=1 // pred_region
      _
    $region21: #{tpu_custom_call.1} parent=1 // pred_fallthru
      _
    %v23 = vld [vmem:[%s0] sm:$0x3]
    %v24 = vld [vmem:[%s1] sm:$0xff]
    %v25 = vld [vmem:[%s1 + $0x8] sm:$0xff]
    %v26 = vld [vmem:[%s1 + $0x10] sm:$0xff]
    %v27 = vld [vmem:[%s1 + $0x18] sm:$0xff]
    %29 = vset.pattern.permute.xlu0 0
    %30 = vperm.xlu0 %29, %v24
    %v31 = vpop.permute.xlu0 %30
    %34 = vset.pattern.permute.xlu0 0
    %35 = vperm.xlu0 %34, %v25
    %v36 = vpop.permute.xlu0 %35
    %39 = vset.pattern.permute.xlu0 0
    %40 = vperm.xlu0 %39, %v26
    %v41 = vpop.permute.xlu0 %40
    %44 = vset.pattern.permute.xlu0 0
    %45 = vperm.xlu0 %44, %v27
    %v46 = vpop.permute.xlu0 %45
    %v48 = vlaneseq
    %v49 = vshrl.u32 %v48, 7
    %v50 = vsub.s32 0, %v49
    %v51 = vrot.slane %v23, %v50
    %v52 = vmul.f32 %v31, %v51
    %v53 = vmul.f32 %v36, %v51
    %v54 = vmul.f32 %v41, %v51
    %v55 = vmul.f32 %v46, %v51
    %56 = vset.pattern.permute.xlu0 1
    %57 = vperm.xlu0 %56, %v24
    %v58 = vpop.permute.xlu0 %57
    %60 = vset.pattern.permute.xlu0 1
    %61 = vperm.xlu0 %60, %v25
    %v62 = vpop.permute.xlu0 %61
    %64 = vset.pattern.permute.xlu0 1
    %65 = vperm.xlu0 %64, %v26
    %v66 = vpop.permute.xlu0 %65
    %68 = vset.pattern.permute.xlu0 1
    %69 = vperm.xlu0 %68, %v27
    %v70 = vpop.permute.xlu0 %69
    %v72 = vlaneseq
    %v73 = vshrl.u32 %v72, 7
    %v74 = vsub.s32 1, %v73
    %v75 = vrot.slane %v23, %v74
    %v76 = vmul.f32 %v58, %v75
    %v77 = vmul.f32 %v62, %v75
    %v78 = vmul.f32 %v66, %v75
    %v79 = vmul.f32 %v70, %v75
    %v80 = vadd.f32 %v52, %v76
    %v81 = vadd.f32 %v53, %v77
    %v82 = vadd.f32 %v54, %v78
    %v83 = vadd.f32 %v55, %v79
    %v84 = vld [vmem:[%s2] sm:$0xff]
    %v85 = vld [vmem:[%s2 + $0x8] sm:$0xff]
    %v86 = vld [vmem:[%s2 + $0x10] sm:$0xff]
    %v87 = vld [vmem:[%s2 + $0x18] sm:$0xff]
    %89 = vset.pattern.permute.xlu0 0
    %90 = vperm.xlu0 %89, %v84
    %v91 = vpop.permute.xlu0 %90
    %94 = vset.pattern.permute.xlu0 0
    %95 = vperm.xlu0 %94, %v85
    %v96 = vpop.permute.xlu0 %95
    %99 = vset.pattern.permute.xlu0 0
    %100 = vperm.xlu0 %99, %v86
    %v101 = vpop.permute.xlu0 %100
    %104 = vset.pattern.permute.xlu0 0
    %105 = vperm.xlu0 %104, %v87
    %v106 = vpop.permute.xlu0 %105
    %v108 = vadd.f32 %v80, %v91
    %v109 = vadd.f32 %v81, %v96
    %v110 = vadd.f32 %v82, %v101
    %v111 = vadd.f32 %v83, %v106
    %v112 = vtanh.pop %v108
    %v113 = vtanh.pop %v109
    %v114 = vtanh.pop %v110
    %v115 = vtanh.pop %v111
    %v116 = vld [vmem:[%s3] sm:$0xff]
    %v117 = vld [vmem:[%s3 + $0x8] sm:$0xff]
    %v118 = vld [vmem:[%s3 + $0x10] sm:$0xff]
    %v119 = vld [vmem:[%s3 + $0x18] sm:$0xff]
    %121 = vset.pattern.permute.xlu0 0
    %122 = vperm.xlu0 %121, %v116
    %v123 = vpop.permute.xlu0 %122
    %126 = vset.pattern.permute.xlu0 0
    %127 = vperm.xlu0 %126, %v117
    %v128 = vpop.permute.xlu0 %127
    %131 = vset.pattern.permute.xlu0 0
    %132 = vperm.xlu0 %131, %v118
    %v133 = vpop.permute.xlu0 %132
    %136 = vset.pattern.permute.xlu0 0
    %137 = vperm.xlu0 %136, %v119
    %v138 = vpop.permute.xlu0 %137
    %v140 = vmul.f32 %v112, %v123
    %v141 = vmul.f32 %v113, %v128
    %v142 = vmul.f32 %v114, %v133
    %v143 = vmul.f32 %v115, %v138
    %vm144 = vcmask 64512
    %v145 = vsel %vm144, %v140, 0.0
    %v146 = vsel %vm144, %v141, 0.0
    %v147 = vadd.f32 %v145, %v146
    %v148 = vsel %vm144, %v142, 0.0
    %v149 = vadd.f32 %v147, %v148
    %v150 = vsel %vm144, %v143, 0.0
    %v151 = vadd.f32 %v149, %v150
    %v152 = vrot.slane %v151, 4
    %v153 = vadd.f32 %v151, %v152
    %v154 = vrot.slane %v153, 2
    %v155 = vadd.f32 %v153, %v154
    %v156 = vrot.slane %v155, 1
    %v157 = vadd.f32 %v155, %v156
    %v158 = vld [vmem:[#allocation2] sm:$0x1]
    %160 = vset.pattern.permute.xlu0 0
    %161 = vperm.xlu0 %160, %v158
    %v162 = vpop.permute.xlu0 %161
    %v164 = vlaneseq
    %v165 = vshrl.u32 %v164, 7
    %v166 = vsub.s32 0, %v165
    %v167 = vrot.slane %v162, %v166
    %v168 = vadd.f32 %v157, %v167
    %v169 = vxor.u32 %v168, 2147483648
    %v170 = vmul.f32 %v169, 1.442695
    %v171 = vpow.pop %v170
    %v172 = vadd.f32 %v171, 1.0
    %v173 = vrcp.pop %v172
    %v174 = vmul.f32 1.0, %v173
    %vm175 = vcmask 57344
    %176 = vst.msk [vmem:[#allocation3] sm:$0x1] %vm175, %v174
    // Predicated region
    $region22: #{tpu_custom_call.1} parent=1 // pred_check
      _
    $region23: #{tpu_custom_call.1} parent=1 // pred_check_branch
      %178 = sbr.rel (0) target = $region25
    $region24: #{tpu_custom_call.1} parent=1 // pred_region
      %s180 = ssub.s32 16, 16
      %181 = vsyncadd [#allocation4], %s180
      %s183 = sshll.u32 [#allocation3], 4
      %s184 = int_to_ptr.vmem [resolvable:$true] %s183
      %186 = dma.vmem_to_hbm [thread:$0]  %s184, 16, %s5, [#allocation4]
    $region25: #{tpu_custom_call.1} parent=1 // pred_fallthru
      _
    // Predicated region
    $region26: #{tpu_custom_call.1} parent=1 // pred_check
      _
    $region27: #{tpu_custom_call.1} parent=1 // pred_check_branch
      %188 = sbr.rel (0) target = $region29
    $region28: #{tpu_custom_call.1} parent=1 // pred_region
      %189 = dma.done [#allocation4], 16
    $region29: #{tpu_custom_call.1} parent=1 // pred_fallthru
      _
    %190 = vsyncpa [#allocation4], 1

</llo_original>
